<compile_context>
chip_gen: v7x
topology: tpu7x:2x2x1
jax: 0.10.0
libtpu: 0.0.40
codegen_flags: <defaults>
</compile_context>

<pallas_src>
import jax
import jax.numpy as jnp
from jax.experimental import pallas as pl
from jax.experimental.pallas import tpu as pltpu


def mlp_kernel(x_ref, w1_ref, b1_ref, w2_ref, b2_ref, o_ref):
    # x_ref:  (TB, IN)  f32      w1_ref: (IN, HP) bf16   b1_ref: (1, HP) f32
    # w2_ref: (HP, CP)  bf16     b2_ref: (1, CP)  f32    o_ref:  (TB, CP) bf16
    # cast activations to bf16 in-kernel (free VPU work under the MXU)
    x = x_ref[...].astype(jnp.bfloat16)
    # fc1 on the MXU (bf16 in, f32 accumulate)
    h = jnp.dot(x, w1_ref[...], preferred_element_type=jnp.float32)
    # bias + ReLU epilogue in f32 on the VPU (v5e has no bf16 VPU path)
    # NOTE(v5e): if TB grows a lot and the bundle shows vst saturating,
    # process this epilogue + recast in 128-column halves of HP.
    h = jnp.maximum(h + b1_ref[...], 0.0)
    # fc2 on the MXU (cast activations back to bf16, accumulate in f32)
    out = jnp.dot(h.astype(jnp.bfloat16), w2_ref[...],
                  preferred_element_type=jnp.float32)
    o_ref[...] = (out + b2_ref[...]).astype(o_ref.dtype)


def _round_up(n, m):
    return ((n + m - 1) // m) * m


def _choose_tb(batch):
    """Pick a batch tile: full batch when tiny, else >=2 tiles, capped at 512."""
    if batch <= 8:
        return batch                       # full-dim block (no sublane constraint)
    # split into at least two tiles so v7x's second TC gets work; 512-row tiles
    # keep per-step overhead small and stay far under any VMEM limit.
    return min(512, _round_up(-(-batch // 2), 8))


def prepare_params(w1, b1, w2, b2):
    """One-time pad + cast of parameters to hardware-friendly shapes.

    Zero padding preserves semantics: padded hidden units see zero weights/bias
    -> relu(0)=0 -> contribute 0; padded classes are sliced away.
    Call this once at init, NOT per forward call.
    """
    in_f, hidden = w1.shape
    classes = w2.shape[1]
    hp = _round_up(hidden, 256)            # full 256x256 MXU feeds (v6e/v7x)
    cp = _round_up(classes, 128)           # lane-dense output, unmasked vst
    w1_p = jnp.zeros((in_f, hp), jnp.bfloat16).at[:, :hidden].set(w1.astype(jnp.bfloat16))
    b1_p = jnp.zeros((1, hp), jnp.float32).at[0, :hidden].set(b1)
    w2_p = jnp.zeros((hp, cp), jnp.bfloat16).at[:hidden, :classes].set(w2.astype(jnp.bfloat16))
    b2_p = jnp.zeros((1, cp), jnp.float32).at[0, :classes].set(b2)
    return w1_p, b1_p, w2_p, b2_p


def mlp_forward(x, w1_p, b1_p, w2_p, b2_p, *, num_classes):
    """x: (B, C, H, W) or (B, in_features) f32 -> (B, num_classes) f32."""
    if x.ndim == 4:
        x = x.reshape(x.shape[0], -1)      # mirror torch's x.view(B, -1)
    B, IN = x.shape
    HP = w1_p.shape[1]
    CP = w2_p.shape[1]

    TB = _choose_tb(B)
    nb = pl.cdiv(B, TB)                    # partial last tile handled by Pallas

    cost = pl.CostEstimate(
        flops=2 * B * (IN * HP + HP * CP),
        transcendentals=0,
        bytes_accessed=(B * IN * 4                      # x read (f32)
                        + B * CP * 2                    # output write (bf16)
                        + (IN * HP + HP * CP) * 2       # weights (bf16)
                        + (HP + CP) * 4))               # biases (f32)

    out = pl.pallas_call(
        mlp_kernel,
        out_shape=jax.ShapeDtypeStruct((B, CP), jnp.bfloat16),
        grid=(nb,),
        in_specs=[
            pl.BlockSpec((TB, IN), lambda i: (i, 0)),   # activations: tiled over batch
            pl.BlockSpec((IN, HP), lambda i: (0, 0)),   # weights: resident across grid
            pl.BlockSpec((1, HP), lambda i: (0, 0)),
            pl.BlockSpec((HP, CP), lambda i: (0, 0)),
            pl.BlockSpec((1, CP), lambda i: (0, 0)),
        ],
        out_specs=pl.BlockSpec((TB, CP), lambda i: (i, 0)),
        compiler_params=pltpu.CompilerParams(
            dimension_semantics=("parallel",)),         # shard batch across TCs (v7x)
        cost_estimate=cost,
    )(x, w1_p, b1_p, w2_p, b2_p)

    return out[:, :num_classes].astype(jnp.float32)


def init_params(key, in_features=784, hidden_dim=200, num_classes=10):
    """Deterministic init mimicking nn.Linear's U(-1/sqrt(fan_in), 1/sqrt(fan_in))."""
    k1, k2, k3, k4 = jax.random.split(key, 4)
    lim1 = 1.0 / jnp.sqrt(in_features)
    lim2 = 1.0 / jnp.sqrt(hidden_dim)
    # stored as (in, out) for the kernel's x @ W convention
    w1 = jax.random.uniform(k1, (in_features, hidden_dim), jnp.float32, -lim1, lim1)
    b1 = jax.random.uniform(k2, (hidden_dim,), jnp.float32, -lim1, lim1)
    w2 = jax.random.uniform(k3, (hidden_dim, num_classes), jnp.float32, -lim2, lim2)
    b2 = jax.random.uniform(k4, (num_classes,), jnp.float32, -lim2, lim2)
    return w1, b1, w2, b2


if __name__ == "__main__":
    key = jax.random.PRNGKey(0)
    kx, kp = jax.random.split(key)

    # MNIST-like input: (B, 1, 28, 28) -> flattened to 784 inside forward
    B, IN, HID, CLS = 2, 784, 200, 10
    x = jax.random.normal(kx, (B, 1, 28, 28), jnp.float32)
    w1, b1, w2, b2 = init_params(kp, IN, HID, CLS)

    # Parameter prep hoisted out of the per-call path (done once here).
    w1_p, b1_p, w2_p, b2_p = prepare_params(w1, b1, w2, b2)

    fwd = jax.jit(mlp_forward, static_argnames=("num_classes",))
    out = fwd(x, w1_p, b1_p, w2_p, b2_p, num_classes=CLS)
    out = jax.block_until_ready(out)
    assert out.shape == (B, CLS)

    # reference check in plain JAX (mirror the bf16 rounding of MXU inputs/output)
    x_flat = x.reshape(B, -1)
    xb = x_flat.astype(jnp.bfloat16).astype(jnp.float32)
    w1b = w1.astype(jnp.bfloat16).astype(jnp.float32)
    w2b = w2.astype(jnp.bfloat16).astype(jnp.float32)
    h_ref = jnp.maximum(xb @ w1b + b1, 0.0)
    ref = h_ref.astype(jnp.bfloat16).astype(jnp.float32) @ w2b + b2
    ref = ref.astype(jnp.bfloat16).astype(jnp.float32)   # mirror bf16 output store
    assert jnp.allclose(out, ref, atol=3e-2, rtol=3e-2), (
        f"max abs err {jnp.max(jnp.abs(out - ref))}")

    print("KERNEL_OK")
</pallas_src>

<mosaic_0001>
module attributes {stable_mosaic.version = 11 : i64} {
  func.func @mlp_kernel(%arg0: i32, %arg1: memref<2x784xf32, #tpu.memory_space<vmem>>, %arg2: memref<784x256xbf16, #tpu.memory_space<vmem>>, %arg3: memref<1x256xf32, #tpu.memory_space<vmem>>, %arg4: memref<256x128xbf16, #tpu.memory_space<vmem>>, %arg5: memref<1x128xf32, #tpu.memory_space<vmem>>, %arg6: memref<2x128xbf16, #tpu.memory_space<vmem>>) attributes {dimension_semantics = [#tpu.dimension_semantics<parallel>], iteration_bounds = array<i64: 1>, scalar_prefetch = 0 : i64, scratch_operands = 0 : i64, tpu.core_type = #tpu.core_type<tc>, window_params = [{transform_indices = @transform_0, window_bounds = array<i64: 2, 784>}, {pipeline_mode = #tpu.pipeline_mode<synchronous>, transform_indices = @transform_1, window_bounds = array<i64: 784, 256>}, {pipeline_mode = #tpu.pipeline_mode<synchronous>, transform_indices = @transform_2, window_bounds = array<i64: 1, 256>}, {pipeline_mode = #tpu.pipeline_mode<synchronous>, transform_indices = @transform_3, window_bounds = array<i64: 256, 128>}, {pipeline_mode = #tpu.pipeline_mode<synchronous>, transform_indices = @transform_4, window_bounds = array<i64: 1, 128>}, {transform_indices = @transform_5, window_bounds = array<i64: 2, 128>}]} {
    %c0 = arith.constant 0 : index
    %c0_0 = arith.constant 0 : index
    %0 = vector.load %arg1[%c0, %c0_0] : memref<2x784xf32, #tpu.memory_space<vmem>>, vector<2x784xf32>
    %1 = arith.truncf %0 : vector<2x784xf32> to vector<2x784xbf16>
    %c0_1 = arith.constant 0 : index
    %c0_2 = arith.constant 0 : index
    %2 = vector.load %arg2[%c0_1, %c0_2] : memref<784x256xbf16, #tpu.memory_space<vmem>>, vector<784x256xbf16>
    %cst = arith.constant dense<0.000000e+00> : vector<2x256xf32>
    %3 = tpu.matmul %1, %2, %cst {dimension_numbers = #tpu.dot_dimension_numbers<[1], [0], [0], [1], [0, 0, 1, 1], [], []>} : vector<2x784xbf16>, vector<784x256xbf16>, vector<2x256xf32> -> vector<2x256xf32>
    %c0_3 = arith.constant 0 : index
    %c0_4 = arith.constant 0 : index
    %4 = vector.load %arg3[%c0_3, %c0_4] : memref<1x256xf32, #tpu.memory_space<vmem>>, vector<1x256xf32>
    %5 = vector.broadcast %4 : vector<1x256xf32> to vector<2x256xf32>
    %6 = arith.addf %3, %5 : vector<2x256xf32>
    %cst_5 = arith.constant 0.000000e+00 : f32
    %7 = vector.broadcast %cst_5 : f32 to vector<2x256xf32>
    %8 = arith.maximumf %6, %7 : vector<2x256xf32>
    %9 = arith.truncf %8 : vector<2x256xf32> to vector<2x256xbf16>
    %c0_6 = arith.constant 0 : index
    %c0_7 = arith.constant 0 : index
    %10 = vector.load %arg4[%c0_6, %c0_7] : memref<256x128xbf16, #tpu.memory_space<vmem>>, vector<256x128xbf16>
    %cst_8 = arith.constant dense<0.000000e+00> : vector<2x128xf32>
    %11 = tpu.matmul %9, %10, %cst_8 {dimension_numbers = #tpu.dot_dimension_numbers<[1], [0], [0], [1], [0, 0, 1, 1], [], []>} : vector<2x256xbf16>, vector<256x128xbf16>, vector<2x128xf32> -> vector<2x128xf32>
    %c0_9 = arith.constant 0 : index
    %c0_10 = arith.constant 0 : index
    %12 = vector.load %arg5[%c0_9, %c0_10] : memref<1x128xf32, #tpu.memory_space<vmem>>, vector<1x128xf32>
    %13 = vector.broadcast %12 : vector<1x128xf32> to vector<2x128xf32>
    %14 = arith.addf %11, %13 : vector<2x128xf32>
    %15 = arith.truncf %14 : vector<2x128xf32> to vector<2x128xbf16>
    %c0_11 = arith.constant 0 : index
    %c0_12 = arith.constant 0 : index
    %16 = vector.load %arg6[%c0_11, %c0_12] : memref<2x128xbf16, #tpu.memory_space<vmem>>, vector<2x128xbf16>
    tpu.vector_store %arg6[%c0_11, %c0_12], %15 {strides = array<i32>} : memref<2x128xbf16, #tpu.memory_space<vmem>>, vector<2x128xbf16>,
    return
  }
  func.func @transform_0(%arg0: i32) -> (i32, i32) {
    %c0_i32 = arith.constant 0 : i32
    %c0_i32_0 = arith.constant 0 : i32
    return %arg0, %c0_i32 : i32, i32
  }
  func.func @transform_1(%arg0: i32) -> (i32, i32) {
    %c0_i32 = arith.constant 0 : i32
    %c0_i32_0 = arith.constant 0 : i32
    %c0_i32_1 = arith.constant 0 : i32
    return %c0_i32, %c0_i32_0 : i32, i32
  }
  func.func @transform_2(%arg0: i32) -> (i32, i32) {
    %c0_i32 = arith.constant 0 : i32
    %c0_i32_0 = arith.constant 0 : i32
    %c0_i32_1 = arith.constant 0 : i32
    return %c0_i32, %c0_i32_0 : i32, i32
  }
  func.func @transform_3(%arg0: i32) -> (i32, i32) {
    %c0_i32 = arith.constant 0 : i32
    %c0_i32_0 = arith.constant 0 : i32
    %c0_i32_1 = arith.constant 0 : i32
    return %c0_i32, %c0_i32_0 : i32, i32
  }
  func.func @transform_4(%arg0: i32) -> (i32, i32) {
    %c0_i32 = arith.constant 0 : i32
    %c0_i32_0 = arith.constant 0 : i32
    %c0_i32_1 = arith.constant 0 : i32
    return %c0_i32, %c0_i32_0 : i32, i32
  }
  func.func @transform_5(%arg0: i32) -> (i32, i32) {
    %c0_i32 = arith.constant 0 : i32
    %c0_i32_0 = arith.constant 0 : i32
    return %arg0, %c0_i32 : i32, i32
  }
}

</mosaic_0001>

<llo_original>
// kernel: mlp_forward.1
$region0: #{mlp_forward.1}
  #allocation0 [shape = 'u32[]', space=smem, size = 0x4, offset = 0x4, fixed_abs, tag = 'smem constant byte address 0x4 - core index']
  #allocation1 [shape = 'u32[144,128]{1,0:T(1,128)}', space=vmem, size = 0x12000, scoped, tag = 'internal scratch']
  %s0 = inlined_call_operand.vmem [shape: f32[2,784], index: 0, kind: input, shape index: {}]
  %s1 = inlined_call_operand.hbm [shape: bf16[784,256], index: 1, kind: input, shape index: {}]
  %s2 = inlined_call_operand.vmem [shape: f32[1,256], index: 2, kind: input, shape index: {}]
  %s3 = inlined_call_operand.vmem [shape: bf16[256,128], index: 3, kind: input, shape index: {}]
  %s4 = inlined_call_operand.vmem [shape: f32[1,128], index: 4, kind: input, shape index: {}]
  %s5 = inlined_call_operand.vmem [shape: bf16[2,128], index: 5, kind: output, shape index: {}]
  %s6 = sld [smem:[#allocation0]]
  $region34: #{mlp_forward.1} parent=0
    _
  %s8 = ssub.s32 1, %s6
  %s9 = scalar_select 0, %s8, %s6
  $region1: #{mlp_forward.1} parent=0
    #allocation2 [shape = 'u8[401408]{0}', space=vmem, size = 0x62000, scoped, tag = 'input window, operand 1, single buffered']
    #allocation3 [shape = 's32[1]{0}', space=sflag, size = 0x4, scoped, tag = 'scoped memory for mlp_forward.1']
    %10 = vsyncpa [#allocation3], 0
    // Predicated region
    $region2: #{mlp_forward.1} parent=1 // pred_check
      _
    $region3: #{mlp_forward.1} parent=1 // pred_check_branch
      %12 = sbr.rel (0) target = $region5
    $region4: #{mlp_forward.1} parent=1 // pred_region
      _
    $region5: #{mlp_forward.1} parent=1 // pred_fallthru
      _
    // Predicated region
    $region6: #{mlp_forward.1} parent=1 // pred_check
      _
    $region7: #{mlp_forward.1} parent=1 // pred_check_branch
      %14 = sbr.rel (0) target = $region9
    $region8: #{mlp_forward.1} parent=1 // pred_region
      %s16 = ssub.s32 12544, 12544
      %17 = vsyncadd [#allocation3], %s16
      %s18 = sshll.u32 [#allocation2], 4
      %s19 = int_to_ptr.vmem [resolvable:$true] %s18
      %24 = dma.hbm_to_vmem [thread:$0]  %s1, 12544, %s19, [#allocation3], 128, 128, 8
    $region9: #{mlp_forward.1} parent=1 // pred_fallthru
      _
    // Predicated region
    $region10: #{mlp_forward.1} parent=1 // pred_check
      _
    $region11: #{mlp_forward.1} parent=1 // pred_check_branch
      %26 = sbr.rel (0) target = $region13
    $region12: #{mlp_forward.1} parent=1 // pred_region
      _
    $region13: #{mlp_forward.1} parent=1 // pred_fallthru
      _
    // Predicated region
    $region14: #{mlp_forward.1} parent=1 // pred_check
      _
    $region15: #{mlp_forward.1} parent=1 // pred_check_branch
      %28 = sbr.rel (0) target = $region17
    $region16: #{mlp_forward.1} parent=1 // pred_region
      _
    $region17: #{mlp_forward.1} parent=1 // pred_fallthru
      _
    // Predicated region
    $region18: #{mlp_forward.1} parent=1 // pred_check
      _
    $region19: #{mlp_forward.1} parent=1 // pred_check_branch
      %30 = sbr.rel (0) target = $region21
    $region20: #{mlp_forward.1} parent=1 // pred_region
      _
    $region21: #{mlp_forward.1} parent=1 // pred_fallthru
      _
    // Predicated region
    $region22: #{mlp_forward.1} parent=1 // pred_check
      _
    $region23: #{mlp_forward.1} parent=1 // pred_check_branch
      %32 = sbr.rel (0) target = $region25
    $region24: #{mlp_forward.1} parent=1 // pred_region
      %33 = dma.done [#allocation3], 12544
    $region25: #{mlp_forward.1} parent=1 // pred_fallthru
      _
    %v35 = vld [vmem:[%s0] sm:$0xff]
    %v36 = vld [vmem:[%s0 + $0x8] sm:$0x3f]
    %v39 = vcombine.high %v35, %v35
    %v41 = vunpack.c.l.s4 1983009808
    %v42 = vunpack.c.0.s8 %v41
    %v43 = vlaneseq
    %v44 = vshrl.u32 %v43, 7
    %v45 = vsub.s32 %v42, %v44
    %v46 = vrot.slane %v35, %v45
    %v48 = vunpack.c.l.s4 1983009808
    %v49 = vunpack.c.0.s8 %v48
    %v50 = vlaneseq
    %v51 = vshrl.u32 %v50, 7
    %v52 = vsub.s32 %v49, %v51
    %v53 = vrot.slane %v39, %v52
    %v54 = vcombine.high %v46, %v46
    %v55 = vcombine.high %v53, %v53
    %v56 = vcombine.high %v36, %v36
    %v58 = vunpack.c.l.s4 1983009808
    %v59 = vunpack.c.0.s8 %v58
    %v60 = vlaneseq
    %v61 = vshrl.u32 %v60, 7
    %v62 = vsub.s32 %v59, %v61
    %v63 = vrot.slane %v36, %v62
    %v65 = vunpack.c.l.s4 1983009808
    %v66 = vunpack.c.0.s8 %v65
    %v67 = vlaneseq
    %v68 = vshrl.u32 %v67, 7
    %v69 = vsub.s32 %v66, %v68
    %v70 = vrot.slane %v56, %v69
    %v71 = vcombine.high %v63, %v63
    %v79 = vpack.c.bf16 %v46, %v46
    %v80 = vpack.c.bf16 %v54, %v54
    %v81 = vpack.c.bf16 %v53, %v53
    %v82 = vpack.c.bf16 %v55, %v55
    %v83 = vpack.c.bf16 %v63, %v63
    %v84 = vpack.c.bf16 %v71, %v71
    %v85 = vpack.c.bf16 %v70, %v70
    %v86 = vld [vmem:[#allocation2] sm:$0xff]
    %v87 = vld [vmem:[#allocation2 + $0x8] sm:$0xff]
    %v88 = vld [vmem:[#allocation2 + $0x10] sm:$0xff]
    %v89 = vld [vmem:[#allocation2 + $0x18] sm:$0xff]
    %v90 = vld [vmem:[#allocation2 + $0x20] sm:$0xff]
    %v91 = vld [vmem:[#allocation2 + $0x28] sm:$0xff]
    %v92 = vld [vmem:[#allocation2 + $0x30] sm:$0xff]
    %v93 = vld [vmem:[#allocation2 + $0x38] sm:$0xff]
    %v94 = vld [vmem:[#allocation2 + $0x40] sm:$0xff]
    %v95 = vld [vmem:[#allocation2 + $0x48] sm:$0xff]
    %v96 = vld [vmem:[#allocation2 + $0x50] sm:$0xff]
    %v97 = vld [vmem:[#allocation2 + $0x58] sm:$0xff]
    %v98 = vld [vmem:[#allocation2 + $0x60] sm:$0xff]
    %v99 = vld [vmem:[#allocation2 + $0x68] sm:$0xff]
    %v100 = vld [vmem:[#allocation2 + $0x70] sm:$0xff]
    %v101 = vld [vmem:[#allocation2 + $0x78] sm:$0xff]
    %v102 = vld [vmem:[#allocation2 + $0x80] sm:$0xff]
    %v103 = vld [vmem:[#allocation2 + $0x88] sm:$0xff]
    %v104 = vld [vmem:[#allocation2 + $0x90] sm:$0xff]
    %v105 = vld [vmem:[#allocation2 + $0x98] sm:$0xff]
    %v106 = vld [vmem:[#allocation2 + $0xa0] sm:$0xff]
    %v107 = vld [vmem:[#allocation2 + $0xa8] sm:$0xff]
    %v108 = vld [vmem:[#allocation2 + $0xb0] sm:$0xff]
    %v109 = vld [vmem:[#allocation2 + $0xb8] sm:$0xff]
    %v110 = vld [vmem:[#allocation2 + $0xc0] sm:$0xff]
    %v111 = vld [vmem:[#allocation2 + $0xc8] sm:$0xff]
    %v112 = vld [vmem:[#allocation2 + $0xd0] sm:$0xff]
    %v113 = vld [vmem:[#allocation2 + $0xd8] sm:$0xff]
    %v114 = vld [vmem:[#allocation2 + $0xe0] sm:$0xff]
    %v115 = vld [vmem:[#allocation2 + $0xe8] sm:$0xff]
    %v116 = vld [vmem:[#allocation2 + $0xf0] sm:$0xff]
    %v117 = vld [vmem:[#allocation2 + $0xf8] sm:$0xff]
    %v118 = vld [vmem:[#allocation2 + $0x100] sm:$0xff]
    %v119 = vld [vmem:[#allocation2 + $0x108] sm:$0xff]
    %v120 = vld [vmem:[#allocation2 + $0x110] sm:$0xff]
    %v121 = vld [vmem:[#allocation2 + $0x118] sm:$0xff]
    %v122 = vld [vmem:[#allocation2 + $0x120] sm:$0xff]
    %v123 = vld [vmem:[#allocation2 + $0x128] sm:$0xff]
    %v124 = vld [vmem:[#allocation2 + $0x130] sm:$0xff]
    %v125 = vld [vmem:[#allocation2 + $0x138] sm:$0xff]
    %v126 = vld [vmem:[#allocation2 + $0x140] sm:$0xff]
    %v127 = vld [vmem:[#allocation2 + $0x148] sm:$0xff]
    %v128 = vld [vmem:[#allocation2 + $0x150] sm:$0xff]
    %v129 = vld [vmem:[#allocation2 + $0x158] sm:$0xff]
    %v130 = vld [vmem:[#allocation2 + $0x160] sm:$0xff]
    %v131 = vld [vmem:[#allocation2 + $0x168] sm:$0xff]
    %v132 = vld [vmem:[#allocation2 + $0x170] sm:$0xff]
    %v133 = vld [vmem:[#allocation2 + $0x178] sm:$0xff]
    %v134 = vld [vmem:[#allocation2 + $0x180] sm:$0xff]
    %v135 = vld [vmem:[#allocation2 + $0x188] sm:$0xff]
    %v136 = vld [vmem:[#allocation2 + $0x190] sm:$0xff]
    %v137 = vld [vmem:[#allocation2 + $0x198] sm:$0xff]
    %v138 = vld [vmem:[#allocation2 + $0x1a0] sm:$0xff]
    %v139 = vld [vmem:[#allocation2 + $0x1a8] sm:$0xff]
    %v140 = vld [vmem:[#allocation2 + $0x1b0] sm:$0xff]
    %v141 = vld [vmem:[#allocation2 + $0x1b8] sm:$0xff]
    %v142 = vld [vmem:[#allocation2 + $0x1c0] sm:$0xff]
    %v143 = vld [vmem:[#allocation2 + $0x1c8] sm:$0xff]
    %v144 = vld [vmem:[#allocation2 + $0x1d0] sm:$0xff]
    %v145 = vld [vmem:[#allocation2 + $0x1d8] sm:$0xff]
    %v146 = vld [vmem:[#allocation2 + $0x1e0] sm:$0xff]
    %v147 = vld [vmem:[#allocation2 + $0x1e8] sm:$0xff]
    %v148 = vld [vmem:[#allocation2 + $0x1f0] sm:$0xff]
    %v149 = vld [vmem:[#allocation2 + $0x1f8] sm:$0xff]
    %v150 = vld [vmem:[#allocation2 + $0x200] sm:$0xff]
    %v151 = vld [vmem:[#allocation2 + $0x208] sm:$0xff]
    %v152 = vld [vmem:[#allocation2 + $0x210] sm:$0xff]
    %v153 = vld [vmem:[#allocation2 + $0x218] sm:$0xff]
    %v154 = vld [vmem:[#allocation2 + $0x220] sm:$0xff]
    %v155 = vld [vmem:[#allocation2 + $0x228] sm:$0xff]
    %v156 = vld [vmem:[#allocation2 + $0x230] sm:$0xff]
    %v157 = vld [vmem:[#allocation2 + $0x238] sm:$0xff]
    %v158 = vld [vmem:[#allocation2 + $0x240] sm:$0xff]
    %v159 = vld [vmem:[#allocation2 + $0x248] sm:$0xff]
    %v160 = vld [vmem:[#allocation2 + $0x250] sm:$0xff]
    %v161 = vld [vmem:[#allocation2 + $0x258] sm:$0xff]
    %v162 = vld [vmem:[#allocation2 + $0x260] sm:$0xff]
    %v163 = vld [vmem:[#allocation2 + $0x268] sm:$0xff]
    %v164 = vld [vmem:[#allocation2 + $0x270] sm:$0xff]
    %v165 = vld [vmem:[#allocation2 + $0x278] sm:$0xff]
    %v166 = vld [vmem:[#allocation2 + $0x280] sm:$0xff]
    %v167 = vld [vmem:[#allocation2 + $0x288] sm:$0xff]
    %v168 = vld [vmem:[#allocation2 + $0x290] sm:$0xff]
    %v169 = vld [vmem:[#allocation2 + $0x298] sm:$0xff]
    %v170 = vld [vmem:[#allocation2 + $0x2a0] sm:$0xff]
    %v171 = vld [vmem:[#allocation2 + $0x2a8] sm:$0xff]
    %v172 = vld [vmem:[#allocation2 + $0x2b0] sm:$0xff]
    %v173 = vld [vmem:[#allocation2 + $0x2b8] sm:$0xff]
    %v174 = vld [vmem:[#allocation2 + $0x2c0] sm:$0xff]
    %v175 = vld [vmem:[#allocation2 + $0x2c8] sm:$0xff]
    %v176 = vld [vmem:[#allocation2 + $0x2d0] sm:$0xff]
    %v177 = vld [vmem:[#allocation2 + $0x2d8] sm:$0xff]
    %v178 = vld [vmem:[#allocation2 + $0x2e0] sm:$0xff]
    %v179 = vld [vmem:[#allocation2 + $0x2e8] sm:$0xff]
    %v180 = vld [vmem:[#allocation2 + $0x2f0] sm:$0xff]
    %v181 = vld [vmem:[#allocation2 + $0x2f8] sm:$0xff]
    %v182 = vld [vmem:[#allocation2 + $0x300] sm:$0xff]
    %v183 = vld [vmem:[#allocation2 + $0x308] sm:$0xff]
    %v184 = vld [vmem:[%s2] sm:$0x3]
    %v186 = vlaneseq
    %v187 = vshrl.u32 %v186, 7
    %v188 = vsub.s32 0, %v187
    %v189 = vrot.slane %v184, %v188
    %v190 = vlaneseq
    %v191 = vshrl.u32 %v190, 7
    %v192 = vsub.s32 1, %v191
    %v193 = vrot.slane %v184, %v192
    %v294 = vunpack.c.l.b16 %v86
    %v295 = vunpack.c.h.b16 %v86
    %v296 = vunpack.c.l.b16 %v87
    %v297 = vunpack.c.h.b16 %v87
    %v298 = vunpack.c.l.b16 %v88
    %v299 = vunpack.c.h.b16 %v88
    %v300 = vunpack.c.l.b16 %v89
    %v301 = vunpack.c.h.b16 %v89
    %v302 = vunpack.c.l.b16 %v90
    %v303 = vunpack.c.h.b16 %v90
    %v304 = vunpack.c.l.b16 %v91
    %v305 = vunpack.c.h.b16 %v91
    %v306 = vunpack.c.l.b16 %v92
    %v307 = vunpack.c.h.b16 %v92
    %v308 = vunpack.c.l.b16 %v93
    %v309 = vunpack.c.h.b16 %v93
    %v310 = vunpack.c.l.b16 %v94
    %v311 = vunpack.c.h.b16 %v94
    %v312 = vunpack.c.l.b16 %v95
    %v313 = vunpack.c.h.b16 %v95
    %v314 = vunpack.c.l.b16 %v96
    %v315 = vunpack.c.h.b16 %v96
    %v316 = vunpack.c.l.b16 %v97
    %v317 = vunpack.c.h.b16 %v97
    %v318 = vunpack.c.l.b16 %v98
    %v319 = vunpack.c.h.b16 %v98
    %v320 = vunpack.c.l.b16 %v99
    %v321 = vunpack.c.h.b16 %v99
    %v322 = vunpack.c.l.b16 %v100
    %v323 = vunpack.c.h.b16 %v100
    %v324 = vunpack.c.l.b16 %v101
    %v325 = vunpack.c.h.b16 %v101
    %v326 = vunpack.c.l.b16 %v102
    %v327 = vunpack.c.h.b16 %v102
    %v328 = vunpack.c.l.b16 %v103
    %v329 = vunpack.c.h.b16 %v103
    %v330 = vunpack.c.l.b16 %v104
    %v331 = vunpack.c.h.b16 %v104
    %v332 = vunpack.c.l.b16 %v105
    %v333 = vunpack.c.h.b16 %v105
    %v334 = vunpack.c.l.b16 %v106
    %v335 = vunpack.c.h.b16 %v106
    %v336 = vunpack.c.l.b16 %v107
    %v337 = vunpack.c.h.b16 %v107
    %v338 = vunpack.c.l.b16 %v108
    %v339 = vunpack.c.h.b16 %v108
    %v340 = vunpack.c.l.b16 %v109
    %v341 = vunpack.c.h.b16 %v109
    %v342 = vunpack.c.l.b16 %v110
    %v343 = vunpack.c.h.b16 %v110
    %v344 = vunpack.c.l.b16 %v111
    %v345 = vunpack.c.h.b16 %v111
    %v346 = vunpack.c.l.b16 %v112
    %v347 = vunpack.c.h.b16 %v112
    %v348 = vunpack.c.l.b16 %v113
    %v349 = vunpack.c.h.b16 %v113
    %v350 = vunpack.c.l.b16 %v114
    %v351 = vunpack.c.h.b16 %v114
    %v352 = vunpack.c.l.b16 %v115
    %v353 = vunpack.c.h.b16 %v115
    %v354 = vunpack.c.l.b16 %v116
    %v355 = vunpack.c.h.b16 %v116
    %v356 = vunpack.c.l.b16 %v117
    %v357 = vunpack.c.h.b16 %v117
    %v358 = vunpack.c.l.b16 %v118
    %v359 = vunpack.c.h.b16 %v118
    %v360 = vunpack.c.l.b16 %v119
    %v361 = vunpack.c.h.b16 %v119
    %v362 = vunpack.c.l.b16 %v120
    %v363 = vunpack.c.h.b16 %v120
    %v364 = vunpack.c.l.b16 %v121
    %v365 = vunpack.c.h.b16 %v121
    %v366 = vunpack.c.l.b16 %v122
    %v367 = vunpack.c.h.b16 %v122
    %v368 = vunpack.c.l.b16 %v123
    %v369 = vunpack.c.h.b16 %v123
    %v370 = vunpack.c.l.b16 %v124
    %v371 = vunpack.c.h.b16 %v124
    %v372 = vunpack.c.l.b16 %v125
    %v373 = vunpack.c.h.b16 %v125
    %v374 = vunpack.c.l.b16 %v126
    %v375 = vunpack.c.h.b16 %v126
    %v376 = vunpack.c.l.b16 %v127
    %v377 = vunpack.c.h.b16 %v127
    %v378 = vunpack.c.l.b16 %v128
    %v379 = vunpack.c.h.b16 %v128
    %v380 = vunpack.c.l.b16 %v129
    %v381 = vunpack.c.h.b16 %v129
    %v382 = vunpack.c.l.b16 %v130
    %v383 = vunpack.c.h.b16 %v130
    %v384 = vunpack.c.l.b16 %v131
    %v385 = vunpack.c.h.b16 %v131
    %v386 = vunpack.c.l.b16 %v132
    %v387 = vunpack.c.h.b16 %v132
    %v388 = vunpack.c.l.b16 %v133
    %v389 = vunpack.c.h.b16 %v133
    %v390 = vunpack.c.l.b16 %v134
    %v391 = vunpack.c.h.b16 %v134
    %v392 = vunpack.c.l.b16 %v135
    %v393 = vunpack.c.h.b16 %v135
    %v394 = vunpack.c.l.b16 %v136
    %v395 = vunpack.c.h.b16 %v136
    %v396 = vunpack.c.l.b16 %v137
    %v397 = vunpack.c.h.b16 %v137
    %v398 = vunpack.c.l.b16 %v138
    %v399 = vunpack.c.h.b16 %v138
    %v400 = vunpack.c.l.b16 %v139
    %v401 = vunpack.c.h.b16 %v139
    %v402 = vunpack.c.l.b16 %v140
    %v403 = vunpack.c.h.b16 %v140
    %v404 = vunpack.c.l.b16 %v141
    %v405 = vunpack.c.h.b16 %v141
    %v406 = vunpack.c.l.b16 %v142
    %v407 = vunpack.c.h.b16 %v142
    %v408 = vunpack.c.l.b16 %v143
    %v409 = vunpack.c.h.b16 %v143
    %v410 = vunpack.c.l.b16 %v144
    %v411 = vunpack.c.h.b16 %v144
    %v412 = vunpack.c.l.b16 %v145
    %v413 = vunpack.c.h.b16 %v145
    %v414 = vunpack.c.l.b16 %v146
    %v415 = vunpack.c.h.b16 %v146
    %v416 = vunpack.c.l.b16 %v147
    %v417 = vunpack.c.h.b16 %v147
    %v418 = vunpack.c.l.b16 %v148
    %v419 = vunpack.c.h.b16 %v148
    %v420 = vunpack.c.l.b16 %v149
    %v421 = vunpack.c.h.b16 %v149
    %v422 = vunpack.c.l.b16 %v150
    %v423 = vunpack.c.h.b16 %v150
    %v424 = vunpack.c.l.b16 %v151
    %v425 = vunpack.c.h.b16 %v151
    %v426 = vunpack.c.l.b16 %v152
    %v427 = vunpack.c.h.b16 %v152
    %v428 = vunpack.c.l.b16 %v153
    %v429 = vunpack.c.h.b16 %v153
    %v430 = vunpack.c.l.b16 %v154
    %v431 = vunpack.c.h.b16 %v154
    %v432 = vunpack.c.l.b16 %v155
    %v433 = vunpack.c.h.b16 %v155
    %v434 = vunpack.c.l.b16 %v156
    %v435 = vunpack.c.h.b16 %v156
    %v436 = vunpack.c.l.b16 %v157
    %v437 = vunpack.c.h.b16 %v157
    %v438 = vunpack.c.l.b16 %v158
    %v439 = vunpack.c.h.b16 %v158
    %v440 = vunpack.c.l.b16 %v159
    %v441 = vunpack.c.h.b16 %v159
    %v442 = vunpack.c.l.b16 %v160
    %v443 = vunpack.c.h.b16 %v160
    %v444 = vunpack.c.l.b16 %v161
    %v445 = vunpack.c.h.b16 %v161
    %v446 = vunpack.c.l.b16 %v162
    %v447 = vunpack.c.h.b16 %v162
    %v448 = vunpack.c.l.b16 %v163
    %v449 = vunpack.c.h.b16 %v163
    %v450 = vunpack.c.l.b16 %v164
    %v451 = vunpack.c.h.b16 %v164
    %v452 = vunpack.c.l.b16 %v165
    %v453 = vunpack.c.h.b16 %v165
    %v454 = vunpack.c.l.b16 %v166
    %v455 = vunpack.c.h.b16 %v166
    %v456 = vunpack.c.l.b16 %v167
    %v457 = vunpack.c.h.b16 %v167
    %v458 = vunpack.c.l.b16 %v168
    %v459 = vunpack.c.h.b16 %v168
    %v460 = vunpack.c.l.b16 %v169
    %v461 = vunpack.c.h.b16 %v169
    %v462 = vunpack.c.l.b16 %v170
    %v463 = vunpack.c.h.b16 %v170
    %v464 = vunpack.c.l.b16 %v171
    %v465 = vunpack.c.h.b16 %v171
    %v466 = vunpack.c.l.b16 %v172
    %v467 = vunpack.c.h.b16 %v172
    %v468 = vunpack.c.l.b16 %v173
    %v469 = vunpack.c.h.b16 %v173
    %v470 = vunpack.c.l.b16 %v174
    %v471 = vunpack.c.h.b16 %v174
    %v472 = vunpack.c.l.b16 %v175
    %v473 = vunpack.c.h.b16 %v175
    %v474 = vunpack.c.l.b16 %v176
    %v475 = vunpack.c.h.b16 %v176
    %v476 = vunpack.c.l.b16 %v177
    %v477 = vunpack.c.h.b16 %v177
    %v478 = vunpack.c.l.b16 %v178
    %v479 = vunpack.c.h.b16 %v178
    %v480 = vunpack.c.l.b16 %v179
    %v481 = vunpack.c.h.b16 %v179
    %v482 = vunpack.c.l.b16 %v180
    %v483 = vunpack.c.h.b16 %v180
    %v484 = vunpack.c.l.b16 %v181
    %v485 = vunpack.c.h.b16 %v181
    %v486 = vunpack.c.l.b16 %v182
    %v487 = vunpack.c.h.b16 %v182
    %v488 = vunpack.c.l.b16 %v183
    %v489 = vunpack.c.h.b16 %v183
    %v490 = vpack.c.b16 %v296, %v294
    %v491 = vpack.c.b16 %v297, %v295
    %v492 = vpack.c.b16 %v300, %v298
    %v493 = vpack.c.b16 %v301, %v299
    %v494 = vpack.c.b16 %v304, %v302
    %v495 = vpack.c.b16 %v305, %v303
    %v496 = vpack.c.b16 %v308, %v306
    %v497 = vpack.c.b16 %v309, %v307
    %v498 = vpack.c.b16 %v312, %v310
    %v499 = vpack.c.b16 %v313, %v311
    %v500 = vpack.c.b16 %v316, %v314
    %v501 = vpack.c.b16 %v317, %v315
    %v502 = vpack.c.b16 %v320, %v318
    %v503 = vpack.c.b16 %v321, %v319
    %v504 = vpack.c.b16 %v324, %v322
    %v505 = vpack.c.b16 %v325, %v323
    %v506 = vpack.c.b16 %v328, %v326
    %v507 = vpack.c.b16 %v329, %v327
    %v508 = vpack.c.b16 %v332, %v330
    %v509 = vpack.c.b16 %v333, %v331
    %v510 = vpack.c.b16 %v336, %v334
    %v511 = vpack.c.b16 %v337, %v335
    %v512 = vpack.c.b16 %v340, %v338
    %v513 = vpack.c.b16 %v341, %v339
    %v514 = vpack.c.b16 %v344, %v342
    %v515 = vpack.c.b16 %v345, %v343
    %v516 = vpack.c.b16 %v348, %v346
    %v517 = vpack.c.b16 %v349, %v347
    %v518 = vpack.c.b16 %v352, %v350
    %v519 = vpack.c.b16 %v353, %v351
    %v520 = vpack.c.b16 %v356, %v354
    %v521 = vpack.c.b16 %v357, %v355
    %v522 = vpack.c.b16 %v360, %v358
    %v523 = vpack.c.b16 %v361, %v359
    %v524 = vpack.c.b16 %v364, %v362
    %v525 = vpack.c.b16 %v365, %v363
    %v526 = vpack.c.b16 %v368, %v366
    %v527 = vpack.c.b16 %v369, %v367
    %v528 = vpack.c.b16 %v372, %v370
    %v529 = vpack.c.b16 %v373, %v371
    %v530 = vpack.c.b16 %v376, %v374
    %v531 = vpack.c.b16 %v377, %v375
    %v532 = vpack.c.b16 %v380, %v378
    %v533 = vpack.c.b16 %v381, %v379
    %v534 = vpack.c.b16 %v384, %v382
    %v535 = vpack.c.b16 %v385, %v383
    %v536 = vpack.c.b16 %v388, %v386
    %v537 = vpack.c.b16 %v389, %v387
    %v538 = vpack.c.b16 %v392, %v390
    %v539 = vpack.c.b16 %v393, %v391
    %v540 = vpack.c.b16 %v396, %v394
    %v541 = vpack.c.b16 %v397, %v395
    %v542 = vpack.c.b16 %v400, %v398
    %v543 = vpack.c.b16 %v401, %v399
    %v544 = vpack.c.b16 %v404, %v402
    %v545 = vpack.c.b16 %v405, %v403
    %v546 = vpack.c.b16 %v408, %v406
    %v547 = vpack.c.b16 %v409, %v407
    %v548 = vpack.c.b16 %v412, %v410
    %v549 = vpack.c.b16 %v413, %v411
    %v550 = vpack.c.b16 %v416, %v414
    %v551 = vpack.c.b16 %v417, %v415
    %v552 = vpack.c.b16 %v420, %v418
    %v553 = vpack.c.b16 %v421, %v419
    %v554 = vpack.c.b16 %v424, %v422
    %v555 = vpack.c.b16 %v425, %v423
    %v556 = vpack.c.b16 %v428, %v426
    %v557 = vpack.c.b16 %v429, %v427
    %v558 = vpack.c.b16 %v432, %v430
    %v559 = vpack.c.b16 %v433, %v431
    %v560 = vpack.c.b16 %v436, %v434
    %v561 = vpack.c.b16 %v437, %v435
    %v562 = vpack.c.b16 %v440, %v438
    %v563 = vpack.c.b16 %v441, %v439
    %v564 = vpack.c.b16 %v444, %v442
    %v565 = vpack.c.b16 %v445, %v443
    %v566 = vpack.c.b16 %v448, %v446
    %v567 = vpack.c.b16 %v449, %v447
    %v568 = vpack.c.b16 %v452, %v450
    %v569 = vpack.c.b16 %v453, %v451
    %v570 = vpack.c.b16 %v456, %v454
    %v571 = vpack.c.b16 %v457, %v455
    %v572 = vpack.c.b16 %v460, %v458
    %v573 = vpack.c.b16 %v461, %v459
    %v574 = vpack.c.b16 %v464, %v462
    %v575 = vpack.c.b16 %v465, %v463
    %v576 = vpack.c.b16 %v468, %v466
    %v577 = vpack.c.b16 %v469, %v467
    %v578 = vpack.c.b16 %v472, %v470
    %v579 = vpack.c.b16 %v473, %v471
    %v580 = vpack.c.b16 %v476, %v474
    %v581 = vpack.c.b16 %v477, %v475
    %v582 = vpack.c.b16 %v480, %v478
    %v583 = vpack.c.b16 %v481, %v479
    %v584 = vpack.c.b16 %v484, %v482
    %v585 = vpack.c.b16 %v485, %v483
    %v586 = vpack.c.b16 %v488, %v486
    %v587 = vpack.c.b16 %v489, %v487
    %vm686 = vcmask 130048
    %v688 = vsel %vm686, %v85, 0
    %690 = vmatprep.subr.bf16.mxu0 %v491
    %691 = vmatpush1.bf16.msra.mxu0 %v490
    %692 = vmatprep.subr.bf16.mxu0 %v493
    %693 = vmatpush1.bf16.msra.mxu0 %v492
    %694 = vmatprep.subr.bf16.mxu0 %v495
    %695 = vmatpush1.bf16.msra.mxu0 %v494
    %696 = vmatprep.subr.bf16.mxu0 %v497
    %697 = vmatpush1.bf16.msra.mxu0 %v496
    %698 = vmatprep.subr.bf16.mxu0 %v499
    %699 = vmatpush1.bf16.msra.mxu0 %v498
    %700 = vmatprep.subr.bf16.mxu0 %v501
    %701 = vmatpush1.bf16.msra.mxu0 %v500
    %702 = vmatprep.subr.bf16.mxu0 %v503
    %703 = vmatpush1.bf16.msra.mxu0 %v502
    %704 = vmatprep.subr.bf16.mxu0 %v505
    %705 = vmatpush1.bf16.msra.mxu0 %v504
    %706 = vmatprep.subr.bf16.mxu0 %v507
    %707 = vmatpush1.bf16.msra.mxu0 %v506
    %708 = vmatprep.subr.bf16.mxu0 %v509
    %709 = vmatpush1.bf16.msra.mxu0 %v508
    %710 = vmatprep.subr.bf16.mxu0 %v511
    %711 = vmatpush1.bf16.msra.mxu0 %v510
    %712 = vmatprep.subr.bf16.mxu0 %v513
    %713 = vmatpush1.bf16.msra.mxu0 %v512
    %714 = vmatprep.subr.bf16.mxu0 %v515
    %715 = vmatpush1.bf16.msra.mxu0 %v514
    %716 = vmatprep.subr.bf16.mxu0 %v517
    %717 = vmatpush1.bf16.msra.mxu0 %v516
    %718 = vmatprep.subr.bf16.mxu0 %v519
    %719 = vmatpush1.bf16.msra.mxu0 %v518
    %720 = vmatprep.subr.bf16.mxu0 %v521
    %721 = vmatpush1.bf16.msra.mxu0 %v520
    %722 = vmatprep.mubr.bf16.mxu0 %v80
    %723 = vmatmul.mubr.bf16.gmra.mrb[0].mxu0 %v79
    %v724 = vpop.f32.mrb[0].mxu0
    %v725 = vadd.f32 %v189, %v724
    %v726 = vpop.f32.mrb[0].mxu0
    %v727 = vadd.f32 %v193, %v726
    %v728 = vpop.f32.mrb[0].mxu0
    %v729 = vpop.f32.mrb[0].mxu0
    %730 = vdwg.mxu0
    %731 = vmatprep.subr.bf16.mxu0 %v523
    %732 = vmatpush1.bf16.msra.mxu0 %v522
    %733 = vmatprep.subr.bf16.mxu0 %v525
    %734 = vmatpush1.bf16.msra.mxu0 %v524
    %735 = vmatprep.subr.bf16.mxu0 %v527
    %736 = vmatpush1.bf16.msra.mxu0 %v526
    %737 = vmatprep.subr.bf16.mxu0 %v529
    %738 = vmatpush1.bf16.msra.mxu0 %v528
    %739 = vmatprep.subr.bf16.mxu0 %v531
    %740 = vmatpush1.bf16.msra.mxu0 %v530
    %741 = vmatprep.subr.bf16.mxu0 %v533
    %742 = vmatpush1.bf16.msra.mxu0 %v532
    %743 = vmatprep.subr.bf16.mxu0 %v535
    %744 = vmatpush1.bf16.msra.mxu0 %v534
    %745 = vmatprep.subr.bf16.mxu0 %v537
    %746 = vmatpush1.bf16.msra.mxu0 %v536
    %747 = vmatprep.subr.bf16.mxu0 %v539
    %748 = vmatpush1.bf16.msra.mxu0 %v538
    %749 = vmatprep.subr.bf16.mxu0 %v541
    %750 = vmatpush1.bf16.msra.mxu0 %v540
    %751 = vmatprep.subr.bf16.mxu0 %v543
    %752 = vmatpush1.bf16.msra.mxu0 %v542
    %753 = vmatprep.subr.bf16.mxu0 %v545
    %754 = vmatpush1.bf16.msra.mxu0 %v544
    %755 = vmatprep.subr.bf16.mxu0 %v547
    %756 = vmatpush1.bf16.msra.mxu0 %v546
    %757 = vmatprep.subr.bf16.mxu0 %v549
    %758 = vmatpush1.bf16.msra.mxu0 %v548
    %759 = vmatprep.subr.bf16.mxu0 %v551
    %760 = vmatpush1.bf16.msra.mxu0 %v550
    %761 = vmatprep.subr.bf16.mxu0 %v553
    %762 = vmatpush1.bf16.msra.mxu0 %v552
    %763 = vmatprep.mubr.bf16.mxu0 %v82
    %764 = vmatmul.mubr.bf16.gmra.mrb[0].mxu0 %v81
    %v765 = vpop.f32.mrb[0].mxu0
    %v766 = vadd.f32 %v725, %v765
    %v767 = vpop.f32.mrb[0].mxu0
    %v768 = vadd.f32 %v727, %v767
    %v769 = vpop.f32.mrb[0].mxu0
    %v770 = vpop.f32.mrb[0].mxu0
    %771 = vdwg.mxu0
    %772 = vmatprep.subr.bf16.mxu0 %v555
    %773 = vmatpush1.bf16.msra.mxu0 %v554
    %774 = vmatprep.subr.bf16.mxu0 %v557
    %775 = vmatpush1.bf16.msra.mxu0 %v556
    %776 = vmatprep.subr.bf16.mxu0 %v559
    %777 = vmatpush1.bf16.msra.mxu0 %v558
    %778 = vmatprep.subr.bf16.mxu0 %v561
    %779 = vmatpush1.bf16.msra.mxu0 %v560
    %780 = vmatprep.subr.bf16.mxu0 %v563
    %781 = vmatpush1.bf16.msra.mxu0 %v562
    %782 = vmatprep.subr.bf16.mxu0 %v565
    %783 = vmatpush1.bf16.msra.mxu0 %v564
    %784 = vmatprep.subr.bf16.mxu0 %v567
    %785 = vmatpush1.bf16.msra.mxu0 %v566
    %786 = vmatprep.subr.bf16.mxu0 %v569
    %787 = vmatpush1.bf16.msra.mxu0 %v568
    %788 = vmatprep.subr.bf16.mxu0 %v571
    %789 = vmatpush1.bf16.msra.mxu0 %v570
    %790 = vmatprep.subr.bf16.mxu0 %v573
    %791 = vmatpush1.bf16.msra.mxu0 %v572
    %792 = vmatprep.subr.bf16.mxu0 %v575
    %793 = vmatpush1.bf16.msra.mxu0 %v574
    %794 = vmatprep.subr.bf16.mxu0 %v577
    %795 = vmatpush1.bf16.msra.mxu0 %v576
    %796 = vmatprep.subr.bf16.mxu0 %v579
    %797 = vmatpush1.bf16.msra.mxu0 %v578
    %798 = vmatprep.subr.bf16.mxu0 %v581
    %799 = vmatpush1.bf16.msra.mxu0 %v580
    %800 = vmatprep.subr.bf16.mxu0 %v583
    %801 = vmatpush1.bf16.msra.mxu0 %v582
    %802 = vmatprep.subr.bf16.mxu0 %v585
    %803 = vmatpush1.bf16.msra.mxu0 %v584
    %804 = vmatprep.mubr.bf16.mxu0 %v84
    %805 = vmatmul.mubr.bf16.gmra.mrb[0].mxu0 %v83
    %v806 = vpop.f32.mrb[0].mxu0
    %v807 = vadd.f32 %v766, %v806
    %v808 = vpop.f32.mrb[0].mxu0
    %v809 = vadd.f32 %v768, %v808
    %v810 = vpop.f32.mrb[0].mxu0
    %v811 = vpop.f32.mrb[0].mxu0
    %812 = vdwg.mxu0
    %813 = vmatprep.subr.bf16.mxu0 %v587
    %814 = vmatpush1.bf16.msra.mxu0 %v586
    %815 = vmatprep.subr.bf16.mxu0 0
    %816 = vmatpush1.bf16.msra.mxu0 0
    %817 = vmatprep.subr.bf16.mxu0 0
    %818 = vmatpush1.bf16.msra.mxu0 0
    %819 = vmatprep.subr.bf16.mxu0 0
    %820 = vmatpush1.bf16.msra.mxu0 0
    %821 = vmatprep.subr.bf16.mxu0 0
    %822 = vmatpush1.bf16.msra.mxu0 0
    %823 = vmatprep.subr.bf16.mxu0 0
    %824 = vmatpush1.bf16.msra.mxu0 0
    %825 = vmatprep.subr.bf16.mxu0 0
    %826 = vmatpush1.bf16.msra.mxu0 0
    %827 = vmatprep.subr.bf16.mxu0 0
    %828 = vmatpush1.bf16.msra.mxu0 0
    %829 = vmatprep.subr.bf16.mxu0 0
    %830 = vmatpush1.bf16.msra.mxu0 0
    %831 = vmatprep.subr.bf16.mxu0 0
    %832 = vmatpush1.bf16.msra.mxu0 0
    %833 = vmatprep.subr.bf16.mxu0 0
    %834 = vmatpush1.bf16.msra.mxu0 0
    %835 = vmatprep.subr.bf16.mxu0 0
    %836 = vmatpush1.bf16.msra.mxu0 0
    %837 = vmatprep.subr.bf16.mxu0 0
    %838 = vmatpush1.bf16.msra.mxu0 0
    %839 = vmatprep.subr.bf16.mxu0 0
    %840 = vmatpush1.bf16.msra.mxu0 0
    %841 = vmatprep.subr.bf16.mxu0 0
    %842 = vmatpush1.bf16.msra.mxu0 0
    %843 = vmatprep.subr.bf16.mxu0 0
    %844 = vmatpush1.bf16.msra.mxu0 0
    %845 = vmatprep.mubr.bf16.mxu0 0
    %846 = vmatmul.mubr.bf16.gmra.mrb[0].mxu0 %v688
    %v847 = vpop.f32.mrb[0].mxu0
    %v848 = vadd.f32 %v807, %v847
    %v849 = vpop.f32.mrb[0].mxu0
    %v850 = vadd.f32 %v809, %v849
    %v851 = vpop.f32.mrb[0].mxu0
    %v852 = vpop.f32.mrb[0].mxu0
    %853 = vdwg.mxu0
    %v854 = vmax.f32 %v848, 0.0
    %v855 = vmax.f32 %v850, 0.0
    %v856 = vpack.c.bf16 %v854, %v854
    %v857 = vpack.c.bf16 %v855, %v855
    %v858 = vld [vmem:[%s3] sm:$0xf]
    %v859 = vld [vmem:[%s3 + $0x4] sm:$0xf]
    %v860 = vld [vmem:[%s3 + $0x8] sm:$0xf]
    %v861 = vld [vmem:[%s3 + $0xc] sm:$0xf]
    %v862 = vld [vmem:[%s3 + $0x10] sm:$0xf]
    %v863 = vld [vmem:[%s3 + $0x14] sm:$0xf]
    %v864 = vld [vmem:[%s3 + $0x18] sm:$0xf]
    %v865 = vld [vmem:[%s3 + $0x1c] sm:$0xf]
    %v866 = vld [vmem:[%s3 + $0x20] sm:$0xf]
    %v867 = vld [vmem:[%s3 + $0x24] sm:$0xf]
    %v868 = vld [vmem:[%s3 + $0x28] sm:$0xf]
    %v869 = vld [vmem:[%s3 + $0x2c] sm:$0xf]
    %v870 = vld [vmem:[%s3 + $0x30] sm:$0xf]
    %v871 = vld [vmem:[%s3 + $0x34] sm:$0xf]
    %v872 = vld [vmem:[%s3 + $0x38] sm:$0xf]
    %v873 = vld [vmem:[%s3 + $0x3c] sm:$0xf]
    %v874 = vld [vmem:[%s3 + $0x40] sm:$0xf]
    %v875 = vld [vmem:[%s3 + $0x44] sm:$0xf]
    %v876 = vld [vmem:[%s3 + $0x48] sm:$0xf]
    %v877 = vld [vmem:[%s3 + $0x4c] sm:$0xf]
    %v878 = vld [vmem:[%s3 + $0x50] sm:$0xf]
    %v879 = vld [vmem:[%s3 + $0x54] sm:$0xf]
    %v880 = vld [vmem:[%s3 + $0x58] sm:$0xf]
    %v881 = vld [vmem:[%s3 + $0x5c] sm:$0xf]
    %v882 = vld [vmem:[%s3 + $0x60] sm:$0xf]
    %v883 = vld [vmem:[%s3 + $0x64] sm:$0xf]
    %v884 = vld [vmem:[%s3 + $0x68] sm:$0xf]
    %v885 = vld [vmem:[%s3 + $0x6c] sm:$0xf]
    %v886 = vld [vmem:[%s3 + $0x70] sm:$0xf]
    %v887 = vld [vmem:[%s3 + $0x74] sm:$0xf]
    %v888 = vld [vmem:[%s3 + $0x78] sm:$0xf]
    %v889 = vld [vmem:[%s3 + $0x7c] sm:$0xf]
    %v890 = vld [vmem:[%s4] sm:$0x1]
    %v892 = vlaneseq
    %v893 = vshrl.u32 %v892, 7
    %v894 = vsub.s32 0, %v893
    %v895 = vrot.slane %v890, %v894
    %v929 = vunpack.c.l.b16 %v858
    %v930 = vunpack.c.l.b16 %v859
    %v931 = vunpack.c.l.b16 %v860
    %v932 = vunpack.c.l.b16 %v861
    %v933 = vunpack.c.l.b16 %v862
    %v934 = vunpack.c.l.b16 %v863
    %v935 = vunpack.c.l.b16 %v864
    %v936 = vunpack.c.l.b16 %v865
    %v937 = vunpack.c.l.b16 %v866
    %v938 = vunpack.c.l.b16 %v867
    %v939 = vunpack.c.l.b16 %v868
    %v940 = vunpack.c.l.b16 %v869
    %v941 = vunpack.c.l.b16 %v870
    %v942 = vunpack.c.l.b16 %v871
    %v943 = vunpack.c.l.b16 %v872
    %v944 = vunpack.c.l.b16 %v873
    %v945 = vunpack.c.l.b16 %v874
    %v946 = vunpack.c.l.b16 %v875
    %v947 = vunpack.c.l.b16 %v876
    %v948 = vunpack.c.l.b16 %v877
    %v949 = vunpack.c.l.b16 %v878
    %v950 = vunpack.c.l.b16 %v879
    %v951 = vunpack.c.l.b16 %v880
    %v952 = vunpack.c.l.b16 %v881
    %v953 = vunpack.c.l.b16 %v882
    %v954 = vunpack.c.l.b16 %v883
    %v955 = vunpack.c.l.b16 %v884
    %v956 = vunpack.c.l.b16 %v885
    %v957 = vunpack.c.l.b16 %v886
    %v958 = vunpack.c.l.b16 %v887
    %v959 = vunpack.c.l.b16 %v888
    %v960 = vunpack.c.l.b16 %v889
    %v961 = vpack.c.b16 %v930, %v929
    %v962 = vpack.c.b16 %v932, %v931
    %v963 = vpack.c.b16 %v934, %v933
    %v964 = vpack.c.b16 %v936, %v935
    %v965 = vpack.c.b16 %v938, %v937
    %v966 = vpack.c.b16 %v940, %v939
    %v967 = vpack.c.b16 %v942, %v941
    %v968 = vpack.c.b16 %v944, %v943
    %v969 = vpack.c.b16 %v946, %v945
    %v970 = vpack.c.b16 %v948, %v947
    %v971 = vpack.c.b16 %v950, %v949
    %v972 = vpack.c.b16 %v952, %v951
    %v973 = vpack.c.b16 %v954, %v953
    %v974 = vpack.c.b16 %v956, %v955
    %v975 = vpack.c.b16 %v958, %v957
    %v976 = vpack.c.b16 %v960, %v959
    %993 = vmatprep.subr.bf16.mxu0 0
    %994 = vmatpush1.bf16.msra.mxu0 %v961
    %995 = vmatprep.subr.bf16.mxu0 0
    %996 = vmatpush1.bf16.msra.mxu0 %v962
    %997 = vmatprep.subr.bf16.mxu0 0
    %998 = vmatpush1.bf16.msra.mxu0 %v963
    %999 = vmatprep.subr.bf16.mxu0 0
    %1000 = vmatpush1.bf16.msra.mxu0 %v964
    %1001 = vmatprep.subr.bf16.mxu0 0
    %1002 = vmatpush1.bf16.msra.mxu0 %v965
    %1003 = vmatprep.subr.bf16.mxu0 0
    %1004 = vmatpush1.bf16.msra.mxu0 %v966
    %1005 = vmatprep.subr.bf16.mxu0 0
    %1006 = vmatpush1.bf16.msra.mxu0 %v967
    %1007 = vmatprep.subr.bf16.mxu0 0
    %1008 = vmatpush1.bf16.msra.mxu0 %v968
    %1009 = vmatprep.subr.bf16.mxu0 0
    %1010 = vmatpush1.bf16.msra.mxu0 %v969
    %1011 = vmatprep.subr.bf16.mxu0 0
    %1012 = vmatpush1.bf16.msra.mxu0 %v970
    %1013 = vmatprep.subr.bf16.mxu0 0
    %1014 = vmatpush1.bf16.msra.mxu0 %v971
    %1015 = vmatprep.subr.bf16.mxu0 0
    %1016 = vmatpush1.bf16.msra.mxu0 %v972
    %1017 = vmatprep.subr.bf16.mxu0 0
    %1018 = vmatpush1.bf16.msra.mxu0 %v973
    %1019 = vmatprep.subr.bf16.mxu0 0
    %1020 = vmatpush1.bf16.msra.mxu0 %v974
    %1021 = vmatprep.subr.bf16.mxu0 0
    %1022 = vmatpush1.bf16.msra.mxu0 %v975
    %1023 = vmatprep.subr.bf16.mxu0 0
    %1024 = vmatpush1.bf16.msra.mxu0 %v976
    %1025 = vmatprep.mubr.bf16.mxu0 %v857
    %1026 = vmatmul.mubr.bf16.gmra.mrb[0].mxu0 %v856
    %v1027 = vpop.f32.mrb[0].mxu0
    %v1028 = vadd.f32 %v895, %v1027
    %v1029 = vpop.f32.mrb[0].mxu0
    %v1030 = vpop.f32.mrb[0].mxu0
    %v1031 = vpop.f32.mrb[0].mxu0
    %1032 = vdwg.mxu0
    %v1033 = vpack.c.bf16 %v1028, %v1028
    %1034 = vst [vmem:[%s5] sm:$0x1] %v1033
    // Predicated region
    $region26: #{mlp_forward.1} parent=1 // pred_check
      _
    $region27: #{mlp_forward.1} parent=1 // pred_check_branch
      %1036 = sbr.rel (0) target = $region29
    $region28: #{mlp_forward.1} parent=1 // pred_region
      _
    $region29: #{mlp_forward.1} parent=1 // pred_fallthru
      _
    // Predicated region
    $region30: #{mlp_forward.1} parent=1 // pred_check
      _
    $region31: #{mlp_forward.1} parent=1 // pred_check_branch
      %1038 = sbr.rel (0) target = $region33
    $region32: #{mlp_forward.1} parent=1 // pred_region
      _
    $region33: #{mlp_forward.1} parent=1 // pred_fallthru
      _
    %1039 = vsyncpa [#allocation3], 1

</llo_original>
